<compile_context>
chip_gen: v5e
topology: v5e:2x2
jax: 0.10.0
libtpu: 0.0.40
codegen_flags: <defaults>
</compile_context>

<pallas_src>
import functools

import jax
import jax.numpy as jnp
from jax.experimental import pallas as pl
from jax.experimental.pallas import tpu as pltpu


def _round_up(a: int, b: int) -> int:
    return (a + b - 1) // b * b


def _layernorm_kernel(x_ref, w_ref, b_ref, o_ref, *, eps, d_model):
    x = x_ref[...].astype(jnp.float32)
    inv_d = 1.0 / float(d_model)

    # One pass over the block for both moments.
    s1 = jnp.sum(x, axis=-1, keepdims=True)
    s2 = jnp.sum(x * x, axis=-1, keepdims=True)
    mean = s1 * inv_d
    var = jnp.maximum(s2 * inv_d - mean * mean, 0.0)  # population var (correction=0)

    # NOTE: matches the module exactly: divide by (sqrt(var) + eps),
    # NOT 1/sqrt(var + eps) as in stock torch.nn.LayerNorm.
    inv = 1.0 / (jnp.sqrt(var) + eps)

    w = w_ref[...].astype(jnp.float32)
    b = b_ref[...].astype(jnp.float32)
    o_ref[...] = ((x - mean) * inv * w + b).astype(o_ref.dtype)


@functools.partial(jax.jit, static_argnames=("eps", "tm"))
def layernorm_pallas(x, w, b, *, eps=1e-5, tm=1024):
    batch, posn, d_model = x.shape
    m = batch * posn
    x2d = x.reshape(m, d_model)
    w2d = w.reshape(1, d_model)
    b2d = b.reshape(1, d_model)

    # Adaptive row tile: never larger than the (8-aligned) row count, so small
    # calls don't do redundant DMA/compute.
    tm_eff = min(tm, _round_up(m, 8))
    # If the whole problem fits in one tile but is big enough to be worth
    # splitting, halve the tile so the grid has >= 2 steps (v7x 2-TC sharding).
    if m >= 512 and pl.cdiv(m, tm_eff) < 2:
        half = _round_up(pl.cdiv(m, 2), 8)
        if half >= 256:
            tm_eff = half

    grid = (pl.cdiv(m, tm_eff),)  # ragged last block is masked by Pallas

    out2d = pl.pallas_call(
        functools.partial(_layernorm_kernel, eps=eps, d_model=d_model),
        out_shape=jax.ShapeDtypeStruct((m, d_model), x.dtype),
        grid_spec=pltpu.PrefetchScalarGridSpec(
            num_scalar_prefetch=0,
            grid=grid,
            in_specs=[
                pl.BlockSpec((tm_eff, d_model), lambda i: (i, 0)),  # x row tile
                pl.BlockSpec((1, d_model), lambda i: (0, 0)),       # scale (resident)
                pl.BlockSpec((1, d_model), lambda i: (0, 0)),       # bias  (resident)
            ],
            out_specs=pl.BlockSpec((tm_eff, d_model), lambda i: (i, 0)),
        ),
        compiler_params=pltpu.CompilerParams(
            # Rows are independent -> parallel axis (megacore / v7x 2-TC sharding).
            dimension_semantics=("parallel",),
            # Double-buffered (tm, 768) f32 in + out at tm=1024 is ~12 MiB;
            # 32 MiB avoids the v5e 16 MiB scoped-default cliff and fits every
            # chip's physical VMEM.
            vmem_limit_bytes=32 << 20,
        ),
    )(x2d, w2d, b2d)

    return out2d.reshape(batch, posn, d_model)


def layernorm_reference(x, w, b, eps=1e-5):
    mean = jnp.mean(x, axis=-1, keepdims=True)
    var = jnp.mean((x - mean) ** 2, axis=-1, keepdims=True)
    return (x - mean) / (jnp.sqrt(var) + eps) * w + b


if __name__ == "__main__":
    # GPT-2 small width, small batch/seq.
    d_model = 768
    eps = 1e-5
    batch, posn = 2, 8

    key = jax.random.PRNGKey(0)
    k_x, k_w, k_b = jax.random.split(key, 3)

    x = jax.random.normal(k_x, (batch, posn, d_model), dtype=jnp.float32)
    w = 1.0 + 0.02 * jax.random.normal(k_w, (d_model,), dtype=jnp.float32)
    b = 0.02 * jax.random.normal(k_b, (d_model,), dtype=jnp.float32)

    out = layernorm_pallas(x, w, b, eps=eps)
    out = jax.block_until_ready(out)

    ref = layernorm_reference(x, w, b, eps)
    assert out.shape == (batch, posn, d_model)
    assert jnp.allclose(out, ref, atol=1e-4, rtol=1e-4), (
        float(jnp.max(jnp.abs(out - ref))))

    print("KERNEL_OK")
</pallas_src>

<mosaic_0001>
module attributes {stable_mosaic.version = 11 : i64} {
  func.func @_layernorm_kernel(%arg0: i32, %arg1: memref<16x768xf32, #tpu.memory_space<vmem>>, %arg2: memref<1x768xf32, #tpu.memory_space<vmem>>, %arg3: memref<1x768xf32, #tpu.memory_space<vmem>>, %arg4: memref<16x768xf32, #tpu.memory_space<vmem>>) attributes {dimension_semantics = [#tpu.dimension_semantics<parallel>], iteration_bounds = array<i64: 1>, scalar_prefetch = 0 : i64, scratch_operands = 0 : i64, tpu.core_type = #tpu.core_type<tc>, window_params = [{transform_indices = @transform_0, window_bounds = array<i64: 16, 768>}, {pipeline_mode = #tpu.pipeline_mode<synchronous>, transform_indices = @transform_1, window_bounds = array<i64: 1, 768>}, {pipeline_mode = #tpu.pipeline_mode<synchronous>, transform_indices = @transform_2, window_bounds = array<i64: 1, 768>}, {transform_indices = @transform_3, window_bounds = array<i64: 16, 768>}]} {
    %c0 = arith.constant 0 : index
    %c0_0 = arith.constant 0 : index
    %0 = vector.load %arg1[%c0, %c0_0] : memref<16x768xf32, #tpu.memory_space<vmem>>, vector<16x768xf32>
    %cst = arith.constant dense<0.000000e+00> : vector<16xf32>
    %1 = vector.multi_reduction <add>, %0, %cst [1] : vector<16x768xf32> to vector<16xf32>
    %2 = vector.shape_cast %1 : vector<16xf32> to vector<16x1xf32>
    %3 = arith.mulf %0, %0 : vector<16x768xf32>
    %cst_1 = arith.constant dense<0.000000e+00> : vector<16xf32>
    %4 = vector.multi_reduction <add>, %3, %cst_1 [1] : vector<16x768xf32> to vector<16xf32>
    %5 = vector.shape_cast %4 : vector<16xf32> to vector<16x1xf32>
    %cst_2 = arith.constant 0.00130208337 : f32
    %6 = vector.broadcast %cst_2 : f32 to vector<16x1xf32>
    %7 = arith.mulf %2, %6 : vector<16x1xf32>
    %cst_3 = arith.constant 0.00130208337 : f32
    %8 = vector.broadcast %cst_3 : f32 to vector<16x1xf32>
    %9 = arith.mulf %5, %8 : vector<16x1xf32>
    %10 = arith.mulf %7, %7 : vector<16x1xf32>
    %11 = arith.subf %9, %10 : vector<16x1xf32>
    %cst_4 = arith.constant 0.000000e+00 : f32
    %12 = vector.broadcast %cst_4 : f32 to vector<16x1xf32>
    %13 = arith.maximumf %11, %12 : vector<16x1xf32>
    %14 = math.sqrt %13 : vector<16x1xf32>
    %cst_5 = arith.constant 9.99999974E-6 : f32
    %15 = vector.broadcast %cst_5 : f32 to vector<16x1xf32>
    %16 = arith.addf %14, %15 : vector<16x1xf32>
    %cst_6 = arith.constant 1.000000e+00 : f32
    %17 = vector.broadcast %cst_6 : f32 to vector<16x1xf32>
    %18 = arith.divf %17, %16 : vector<16x1xf32>
    %c0_7 = arith.constant 0 : index
    %c0_8 = arith.constant 0 : index
    %19 = vector.load %arg2[%c0_7, %c0_8] : memref<1x768xf32, #tpu.memory_space<vmem>>, vector<1x768xf32>
    %c0_9 = arith.constant 0 : index
    %c0_10 = arith.constant 0 : index
    %20 = vector.load %arg3[%c0_9, %c0_10] : memref<1x768xf32, #tpu.memory_space<vmem>>, vector<1x768xf32>
    %21 = vector.broadcast %7 : vector<16x1xf32> to vector<16x768xf32>
    %22 = arith.subf %0, %21 : vector<16x768xf32>
    %23 = vector.broadcast %18 : vector<16x1xf32> to vector<16x768xf32>
    %24 = arith.mulf %22, %23 : vector<16x768xf32>
    %25 = vector.broadcast %19 : vector<1x768xf32> to vector<16x768xf32>
    %26 = arith.mulf %24, %25 : vector<16x768xf32>
    %27 = vector.broadcast %20 : vector<1x768xf32> to vector<16x768xf32>
    %28 = arith.addf %26, %27 : vector<16x768xf32>
    %c0_11 = arith.constant 0 : index
    %c0_12 = arith.constant 0 : index
    %29 = vector.load %arg4[%c0_11, %c0_12] : memref<16x768xf32, #tpu.memory_space<vmem>>, vector<16x768xf32>
    tpu.vector_store %arg4[%c0_11, %c0_12], %28 {strides = array<i32>} : memref<16x768xf32, #tpu.memory_space<vmem>>, vector<16x768xf32>,
    return
  }
  func.func @transform_0(%arg0: i32) -> (i32, i32) {
    %c0_i32 = arith.constant 0 : i32
    %c0_i32_0 = arith.constant 0 : i32
    return %arg0, %c0_i32 : i32, i32
  }
  func.func @transform_1(%arg0: i32) -> (i32, i32) {
    %c0_i32 = arith.constant 0 : i32
    %c0_i32_0 = arith.constant 0 : i32
    %c0_i32_1 = arith.constant 0 : i32
    return %c0_i32, %c0_i32_0 : i32, i32
  }
  func.func @transform_2(%arg0: i32) -> (i32, i32) {
    %c0_i32 = arith.constant 0 : i32
    %c0_i32_0 = arith.constant 0 : i32
    %c0_i32_1 = arith.constant 0 : i32
    return %c0_i32, %c0_i32_0 : i32, i32
  }
  func.func @transform_3(%arg0: i32) -> (i32, i32) {
    %c0_i32 = arith.constant 0 : i32
    %c0_i32_0 = arith.constant 0 : i32
    return %arg0, %c0_i32 : i32, i32
  }
}

</mosaic_0001>

<llo_original>
// kernel: layernorm_pallas.1
$region0: #{layernorm_pallas.1}
  #allocation0 [shape = 'u32[]', space=smem, size = 0x4, offset = 0x4, fixed_abs, tag = 'smem constant byte address 0x4 - core index']
  #allocation1 [shape = 'u32[72,128]{1,0:T(1,128)}', space=vmem, size = 0x9000, scoped, tag = 'internal scratch']
  %s0 = inlined_call_operand.hbm [shape: f32[16,768], index: 0, kind: input, shape index: {}]
  %s1 = inlined_call_operand.vmem [shape: f32[1,768], index: 1, kind: input, shape index: {}]
  %s2 = inlined_call_operand.vmem [shape: f32[1,768], index: 2, kind: input, shape index: {}]
  %s3 = inlined_call_operand.hbm [shape: f32[16,768], index: 3, kind: output, shape index: {}]
  %s4 = sld [smem:[#allocation0]]
  $region26: #{layernorm_pallas.1} parent=0
    _
  %s6 = ssub.s32 1, %s4
  %s7 = scalar_select 0, %s6, %s4
  $region1: #{layernorm_pallas.1} parent=0
    #allocation2 [shape = 'u8[49152]{0}', space=vmem, size = 0xc000, scoped, tag = 'input window, operand 0, single buffered']
    #allocation3 [shape = 's32[1]{0}', space=sflag, size = 0x4, scoped, tag = 'scoped memory for layernorm_pallas.1']
    #allocation4 [shape = 's32[1]{0}', space=sflag, size = 0x4, scoped, tag = 'scoped memory for layernorm_pallas.1']
    #allocation5 [shape = 'u8[49152]{0}', space=vmem, size = 0xc000, scoped, tag = 'output window, operand 0, single buffered']
    %8 = vsyncpa [#allocation3], 0
    %9 = vsyncpa [#allocation4], 0
    // Predicated region
    $region2: #{layernorm_pallas.1} parent=1 // pred_check
      _
    $region3: #{layernorm_pallas.1} parent=1 // pred_check_branch
      %11 = sbr.rel (0) target = $region5
    $region4: #{layernorm_pallas.1} parent=1 // pred_region
      %13 = vsyncadd [#allocation3], 0
      %s14 = sshll.u32 %s0, 4
      %s15 = int_to_ptr.hbm [resolvable:$true] %s14
      %s16 = sshll.u32 [#allocation2], 4
      %s17 = int_to_ptr.vmem [resolvable:$true] %s16
      %22 = dma.hbm_to_vmem [thread:$0]  %s15, 1536, %s17, [#allocation3], 768, 768, 48
    $region5: #{layernorm_pallas.1} parent=1 // pred_fallthru
      _
    // Predicated region
    $region6: #{layernorm_pallas.1} parent=1 // pred_check
      _
    $region7: #{layernorm_pallas.1} parent=1 // pred_check_branch
      %24 = sbr.rel (0) target = $region9
    $region8: #{layernorm_pallas.1} parent=1 // pred_region
      _
    $region9: #{layernorm_pallas.1} parent=1 // pred_fallthru
      _
    // Predicated region
    $region10: #{layernorm_pallas.1} parent=1 // pred_check
      _
    $region11: #{layernorm_pallas.1} parent=1 // pred_check_branch
      %26 = sbr.rel (0) target = $region13
    $region12: #{layernorm_pallas.1} parent=1 // pred_region
      _
    $region13: #{layernorm_pallas.1} parent=1 // pred_fallthru
      _
    // Predicated region
    $region14: #{layernorm_pallas.1} parent=1 // pred_check
      _
    $region15: #{layernorm_pallas.1} parent=1 // pred_check_branch
      %28 = sbr.rel (0) target = $region17
    $region16: #{layernorm_pallas.1} parent=1 // pred_region
      %30 = dma.done [#allocation3], 1536
    $region17: #{layernorm_pallas.1} parent=1 // pred_fallthru
      _
    %v31 = vld [vmem:[#allocation2] sm:$0xff]
    %v32 = vld [vmem:[#allocation2 + $0x8] sm:$0xff]
    %v33 = vld [vmem:[#allocation2 + $0x10] sm:$0xff]
    %v34 = vld [vmem:[#allocation2 + $0x18] sm:$0xff]
    %v35 = vld [vmem:[#allocation2 + $0x20] sm:$0xff]
    %v36 = vld [vmem:[#allocation2 + $0x28] sm:$0xff]
    %v37 = vld [vmem:[#allocation2 + $0x30] sm:$0xff]
    %v38 = vld [vmem:[#allocation2 + $0x38] sm:$0xff]
    %v39 = vld [vmem:[#allocation2 + $0x40] sm:$0xff]
    %v40 = vld [vmem:[#allocation2 + $0x48] sm:$0xff]
    %v41 = vld [vmem:[#allocation2 + $0x50] sm:$0xff]
    %v42 = vld [vmem:[#allocation2 + $0x58] sm:$0xff]
    %v43 = vadd.f32 %v31, %v32
    %v44 = vadd.f32 %v43, %v33
    %v45 = vadd.f32 %v44, %v34
    %v46 = vadd.f32 %v45, %v35
    %v47 = vadd.f32 %v46, %v36
    %48 = vadd.xlane.f32.xlu0 %v47
    %v49 = vpop.xlane.xlu0 %48
    %v50 = vadd.f32 %v37, %v38
    %v51 = vadd.f32 %v50, %v39
    %v52 = vadd.f32 %v51, %v40
    %v53 = vadd.f32 %v52, %v41
    %v54 = vadd.f32 %v53, %v42
    %55 = vadd.xlane.f32.xlu0 %v54
    %v56 = vpop.xlane.xlu0 %55
    %v57 = vmul.f32 %v31, %v31
    %v58 = vmul.f32 %v32, %v32
    %v59 = vmul.f32 %v33, %v33
    %v60 = vmul.f32 %v34, %v34
    %v61 = vmul.f32 %v35, %v35
    %v62 = vmul.f32 %v36, %v36
    %v63 = vmul.f32 %v37, %v37
    %v64 = vmul.f32 %v38, %v38
    %v65 = vmul.f32 %v39, %v39
    %v66 = vmul.f32 %v40, %v40
    %v67 = vmul.f32 %v41, %v41
    %v68 = vmul.f32 %v42, %v42
    %v69 = vadd.f32 %v57, %v58
    %v70 = vadd.f32 %v69, %v59
    %v71 = vadd.f32 %v70, %v60
    %v72 = vadd.f32 %v71, %v61
    %v73 = vadd.f32 %v72, %v62
    %74 = vadd.xlane.f32.xlu0 %v73
    %v75 = vpop.xlane.xlu0 %74
    %v76 = vadd.f32 %v63, %v64
    %v77 = vadd.f32 %v76, %v65
    %v78 = vadd.f32 %v77, %v66
    %v79 = vadd.f32 %v78, %v67
    %v80 = vadd.f32 %v79, %v68
    %81 = vadd.xlane.f32.xlu0 %v80
    %v82 = vpop.xlane.xlu0 %81
    %v83 = vmul.f32 %v49, 0.0013020834
    %v84 = vmul.f32 %v56, 0.0013020834
    %v85 = vmul.f32 %v75, 0.0013020834
    %v86 = vmul.f32 %v82, 0.0013020834
    %v87 = vmul.f32 %v83, %v83
    %v88 = vmul.f32 %v84, %v84
    %v89 = vsub.f32 %v85, %v87
    %v90 = vsub.f32 %v86, %v88
    %v91 = vmax.f32 %v89, 0.0
    %v92 = vmax.f32 %v90, 0.0
    %v93 = vrsqrt.pop %v91
    %v94 = vmul.f32 %v93, %v91
    %v95 = vmul.f32 %v94, %v93
    %v96 = vmul.f32 0.5, %v95
    %v97 = vsub.f32 1.5, %v96
    %v98 = vmul.f32 %v93, %v97
    %v99 = vmul.f32 %v91, %v98
    %vm100 = vcmp.eq.f32.partialorder %v91, inf
    %v101 = vsel %vm100, %v91, %v99
    %vm102 = vcmp.eq.f32.partialorder %v91, 0.0
    %v103 = vand.u32 %v91, 2147483648
    %v104 = vsel %vm102, %v103, %v101
    %v105 = vrsqrt.pop %v92
    %v106 = vmul.f32 %v105, %v92
    %v107 = vmul.f32 %v106, %v105
    %v108 = vmul.f32 0.5, %v107
    %v109 = vsub.f32 1.5, %v108
    %v110 = vmul.f32 %v105, %v109
    %v111 = vmul.f32 %v92, %v110
    %vm112 = vcmp.eq.f32.partialorder %v92, inf
    %v113 = vsel %vm112, %v92, %v111
    %vm114 = vcmp.eq.f32.partialorder %v92, 0.0
    %v115 = vand.u32 %v92, 2147483648
    %v116 = vsel %vm114, %v115, %v113
    %v117 = vadd.f32 %v104, 1e-05
    %v118 = vadd.f32 %v116, 1e-05
    %v119 = vrcp.pop %v117
    %v120 = vmul.f32 %v117, %v119
    %v121 = vsub.f32 1.0, %v120
    %v122 = vmul.f32 %v119, %v121
    %v123 = vadd.f32 %v119, %v122
    %vm124 = vweird.f32 %v117
    %vm125 = vweird.f32 %v119
    %vm126 = vmor %vm124, %vm125
    %v127 = vsel %vm126, %v119, %v123
    %v128 = vand.u32 2147483647, %v117
    %vm129 = vcmp.eq.f32.partialorder %v128, 8.507059e+37
    %v130 = vand.u32 %v117, 2147483648
    %v131 = vor.u32 1.1754944e-38, %v130
    %v132 = vsel %vm129, %v131, %v127
    %v133 = vmul.f32 1.0, %v132
    %v134 = vrcp.pop %v118
    %v135 = vmul.f32 %v118, %v134
    %v136 = vsub.f32 1.0, %v135
    %v137 = vmul.f32 %v134, %v136
    %v138 = vadd.f32 %v134, %v137
    %vm139 = vweird.f32 %v118
    %vm140 = vweird.f32 %v134
    %vm141 = vmor %vm139, %vm140
    %v142 = vsel %vm141, %v134, %v138
    %v143 = vand.u32 2147483647, %v118
    %vm144 = vcmp.eq.f32.partialorder %v143, 8.507059e+37
    %v145 = vand.u32 %v118, 2147483648
    %v146 = vor.u32 1.1754944e-38, %v145
    %v147 = vsel %vm144, %v146, %v142
    %v148 = vmul.f32 1.0, %v147
    %v149 = vld [vmem:[%s1] sm:$0x3f]
    %v150 = vld [vmem:[%s2] sm:$0x3f]
    %v151 = vsub.f32 %v31, %v83
    %v152 = vsub.f32 %v32, %v83
    %v153 = vsub.f32 %v33, %v83
    %v154 = vsub.f32 %v34, %v83
    %v155 = vsub.f32 %v35, %v83
    %v156 = vsub.f32 %v36, %v83
    %v157 = vsub.f32 %v37, %v84
    %v158 = vsub.f32 %v38, %v84
    %v159 = vsub.f32 %v39, %v84
    %v160 = vsub.f32 %v40, %v84
    %v161 = vsub.f32 %v41, %v84
    %v162 = vsub.f32 %v42, %v84
    %v163 = vmul.f32 %v151, %v133
    %v164 = vmul.f32 %v152, %v133
    %v165 = vmul.f32 %v153, %v133
    %v166 = vmul.f32 %v154, %v133
    %v167 = vmul.f32 %v155, %v133
    %v168 = vmul.f32 %v156, %v133
    %v169 = vmul.f32 %v157, %v148
    %v170 = vmul.f32 %v158, %v148
    %v171 = vmul.f32 %v159, %v148
    %v172 = vmul.f32 %v160, %v148
    %v173 = vmul.f32 %v161, %v148
    %v174 = vmul.f32 %v162, %v148
    %v176 = vperm.slane %v149, 0
    %v177 = vperm.slane %v149, 1
    %v178 = vperm.slane %v149, 2
    %v179 = vperm.slane %v149, 3
    %v180 = vperm.slane %v149, 4
    %v181 = vperm.slane %v149, 5
    %v188 = vmul.f32 %v163, %v176
    %v189 = vmul.f32 %v164, %v177
    %v190 = vmul.f32 %v165, %v178
    %v191 = vmul.f32 %v166, %v179
    %v192 = vmul.f32 %v167, %v180
    %v193 = vmul.f32 %v168, %v181
    %v194 = vmul.f32 %v169, %v176
    %v195 = vmul.f32 %v170, %v177
    %v196 = vmul.f32 %v171, %v178
    %v197 = vmul.f32 %v172, %v179
    %v198 = vmul.f32 %v173, %v180
    %v199 = vmul.f32 %v174, %v181
    %v201 = vperm.slane %v150, 0
    %v202 = vperm.slane %v150, 1
    %v203 = vperm.slane %v150, 2
    %v204 = vperm.slane %v150, 3
    %v205 = vperm.slane %v150, 4
    %v206 = vperm.slane %v150, 5
    %v213 = vadd.f32 %v188, %v201
    %v214 = vadd.f32 %v189, %v202
    %v215 = vadd.f32 %v190, %v203
    %v216 = vadd.f32 %v191, %v204
    %v217 = vadd.f32 %v192, %v205
    %v218 = vadd.f32 %v193, %v206
    %v219 = vadd.f32 %v194, %v201
    %v220 = vadd.f32 %v195, %v202
    %v221 = vadd.f32 %v196, %v203
    %v222 = vadd.f32 %v197, %v204
    %v223 = vadd.f32 %v198, %v205
    %v224 = vadd.f32 %v199, %v206
    %225 = vst [vmem:[#allocation5] sm:$0xff] %v213
    %226 = vst [vmem:[#allocation5 + $0x8] sm:$0xff] %v214
    %227 = vst [vmem:[#allocation5 + $0x10] sm:$0xff] %v215
    %228 = vst [vmem:[#allocation5 + $0x18] sm:$0xff] %v216
    %229 = vst [vmem:[#allocation5 + $0x20] sm:$0xff] %v217
    %230 = vst [vmem:[#allocation5 + $0x28] sm:$0xff] %v218
    %231 = vst [vmem:[#allocation5 + $0x30] sm:$0xff] %v219
    %232 = vst [vmem:[#allocation5 + $0x38] sm:$0xff] %v220
    %233 = vst [vmem:[#allocation5 + $0x40] sm:$0xff] %v221
    %234 = vst [vmem:[#allocation5 + $0x48] sm:$0xff] %v222
    %235 = vst [vmem:[#allocation5 + $0x50] sm:$0xff] %v223
    %236 = vst [vmem:[#allocation5 + $0x58] sm:$0xff] %v224
    // Predicated region
    $region18: #{layernorm_pallas.1} parent=1 // pred_check
      _
    $region19: #{layernorm_pallas.1} parent=1 // pred_check_branch
      %238 = sbr.rel (0) target = $region21
    $region20: #{layernorm_pallas.1} parent=1 // pred_region
      %240 = vsyncadd [#allocation4], 0
      %s241 = sshll.u32 [#allocation5], 4
      %s242 = int_to_ptr.vmem [resolvable:$true] %s241
      %s243 = sshll.u32 %s3, 4
      %s244 = int_to_ptr.hbm [resolvable:$true] %s243
      %249 = dma.vmem_to_hbm [thread:$0]  %s242, 1536, %s244, [#allocation4], 768, 768, 48
    $region21: #{layernorm_pallas.1} parent=1 // pred_fallthru
      _
    // Predicated region
    $region22: #{layernorm_pallas.1} parent=1 // pred_check
      _
    $region23: #{layernorm_pallas.1} parent=1 // pred_check_branch
      %251 = sbr.rel (0) target = $region25
    $region24: #{layernorm_pallas.1} parent=1 // pred_region
      %253 = dma.done [#allocation4], 1536
    $region25: #{layernorm_pallas.1} parent=1 // pred_fallthru
      _
    %254 = vsyncpa [#allocation3], 1
    %255 = vsyncpa [#allocation4], 1

</llo_original>
